<compile_context>
chip_gen: v7x
topology: tpu7x:2x2x1
jax: 0.10.0
libtpu: 0.0.40
codegen_flags: <defaults>
</compile_context>

<pallas_src>
import jax
import jax.numpy as jnp
from jax.experimental import pallas as pl
from jax.experimental.pallas import tpu as pltpu

SLOWFAST_ALPHA = 4
_LANE = 128


def _slow_gather_kernel(idx_ref, frames_ref, slow_ref):
    # idx_ref (SMEM, scalar-prefetched) is consumed by the input index_map;
    # the body is a pure lane-dense copy of the (C, 1, HW/128, 128) slab that
    # Pallas DMA'd in for us.
    slow_ref[...] = frames_ref[...]


def pack_pathway(frames: jnp.ndarray, alpha: int = SLOWFAST_ALPHA):
    """JAX/Pallas equivalent of PackPathway.forward.

    Args:
      frames: (C, T, H, W) array.
    Returns:
      [slow_pathway (C, T//alpha, H, W), fast_pathway (C, T, H, W)]
    """
    C, T, H, W = frames.shape
    t_slow = T // alpha

    fast = frames  # identity pathway — no compute, returned directly.

    if t_slow == 0:
        # Degenerate T < alpha: empty slow pathway, skip the kernel entirely.
        return [jnp.zeros((C, 0, H, W), frames.dtype), fast]

    # torch.linspace(0, T-1, T//alpha).long(): linspace then truncate toward 0
    # (non-negative values, so astype(int32) matches .long()).
    idx = jnp.linspace(0.0, float(T - 1), t_slow).astype(jnp.int32)

    # Lane-dense layout: flatten the spatial dims (free contiguous reshape), pad
    # the flattened axis up to a multiple of 128 lanes if needed, and expose it
    # as (..., HW_pad // 128, 128) so the block's last two dims cover the full
    # array dims and every store is an unmasked full-lane vst.
    hw = H * W
    hw_pad = ((hw + _LANE - 1) // _LANE) * _LANE
    frames_flat = frames.reshape(C, T, hw)
    if hw_pad != hw:
        frames_flat = jnp.pad(frames_flat, ((0, 0), (0, 0), (0, hw_pad - hw)))
    frames_2d = frames_flat.reshape(C, T, hw_pad // _LANE, _LANE)

    block = (C, 1, hw_pad // _LANE, _LANE)
    # Deeper input pipelining only pays off (and only makes sense) when the grid
    # has at least that many steps.
    n_buf = 3 if t_slow >= 3 else 2

    slow_2d = pl.pallas_call(
        _slow_gather_kernel,
        out_shape=jax.ShapeDtypeStruct((C, t_slow, hw_pad // _LANE, _LANE),
                                       frames.dtype),
        grid_spec=pltpu.PrefetchScalarGridSpec(
            num_scalar_prefetch=1,
            grid=(t_slow,),
            in_specs=[
                # Gather: temporal block index comes from the prefetched idx;
                # one full-channel slab per grid step.
                pl.BlockSpec(block,
                             lambda t, idx_ref: (0, idx_ref[t], 0, 0),
                             pipeline_mode=pl.Buffered(n_buf)),
            ],
            out_specs=pl.BlockSpec(block,
                                   lambda t, idx_ref: (0, t, 0, 0)),
        ),
        compiler_params=pltpu.CompilerParams(
            dimension_semantics=("parallel",)),
    )(idx, frames_2d)

    slow = (slow_2d.reshape(C, t_slow, hw_pad)[:, :, :hw]
            .reshape(C, t_slow, H, W))
    return [slow, fast]


if __name__ == "__main__":
    key = jax.random.PRNGKey(0)
    # Small video clip: C=3 channels, T=8 frames, 16x16 spatial.
    C, T, H, W = 3, 8, 16, 16
    frames = jax.random.normal(key, (C, T, H, W), dtype=jnp.float32)

    slow, fast = pack_pathway(frames)
    jax.block_until_ready(slow)
    jax.block_until_ready(fast)

    # Reference check (plain JAX gather).
    t_slow = T // SLOWFAST_ALPHA
    ref_idx = jnp.linspace(0.0, float(T - 1), t_slow).astype(jnp.int32)
    ref_slow = jnp.take(frames, ref_idx, axis=1)

    assert slow.shape == (C, t_slow, H, W), slow.shape
    assert fast.shape == (C, T, H, W), fast.shape
    assert bool(jnp.array_equal(slow, ref_slow))
    assert bool(jnp.array_equal(fast, frames))

    print("KERNEL_OK")
</pallas_src>

<mosaic_0001>
module attributes {stable_mosaic.version = 11 : i64} {
  func.func @_slow_gather_kernel(%arg0: i32, %arg1: memref<2xi32, #tpu.memory_space<smem>>, %arg2: memref<3x1x2x128xf32, #tpu.memory_space<vmem>>, %arg3: memref<3x1x2x128xf32, #tpu.memory_space<vmem>>) attributes {dimension_semantics = [#tpu.dimension_semantics<parallel>], iteration_bounds = array<i64: 2>, scalar_prefetch = 1 : i64, scratch_operands = 0 : i64, tpu.core_type = #tpu.core_type<tc>, window_params = [{pipeline_mode = #tpu.pipeline_mode<double_buffered>, transform_indices = @transform_0, window_bounds = array<i64: 3, 1, 2, 128>}, {transform_indices = @transform_1, window_bounds = array<i64: 3, 1, 2, 128>}]} {
    %c0 = arith.constant 0 : index
    %c0_0 = arith.constant 0 : index
    %c0_1 = arith.constant 0 : index
    %c0_2 = arith.constant 0 : index
    %0 = vector.load %arg2[%c0, %c0_0, %c0_1, %c0_2] : memref<3x1x2x128xf32, #tpu.memory_space<vmem>>, vector<3x1x2x128xf32>
    %c0_3 = arith.constant 0 : index
    %c0_4 = arith.constant 0 : index
    %c0_5 = arith.constant 0 : index
    %c0_6 = arith.constant 0 : index
    %1 = vector.load %arg3[%c0_3, %c0_4, %c0_5, %c0_6] : memref<3x1x2x128xf32, #tpu.memory_space<vmem>>, vector<3x1x2x128xf32>
    tpu.vector_store %arg3[%c0_3, %c0_4, %c0_5, %c0_6], %0 {strides = array<i32>} : memref<3x1x2x128xf32, #tpu.memory_space<vmem>>, vector<3x1x2x128xf32>,
    return
  }
  func.func @transform_0(%arg0: i32, %arg1: memref<2xi32, #tpu.memory_space<smem>>) -> (i32, i32, i32, i32) {
    %0 = arith.index_cast %arg0 : i32 to index
    %1 = memref.load %arg1[%0] : memref<2xi32, #tpu.memory_space<smem>>
    %c0_i32 = arith.constant 0 : i32
    %c0_i32_0 = arith.constant 0 : i32
    %c0_i32_1 = arith.constant 0 : i32
    %c0_i32_2 = arith.constant 0 : i32
    return %c0_i32, %1, %c0_i32_0, %c0_i32_1 : i32, i32, i32, i32
  }
  func.func @transform_1(%arg0: i32, %arg1: memref<2xi32, #tpu.memory_space<smem>>) -> (i32, i32, i32, i32) {
    %c0_i32 = arith.constant 0 : i32
    %c0_i32_0 = arith.constant 0 : i32
    %c0_i32_1 = arith.constant 0 : i32
    %c0_i32_2 = arith.constant 0 : i32
    return %c0_i32, %arg0, %c0_i32_0, %c0_i32_1 : i32, i32, i32, i32
  }
}

</mosaic_0001>

<llo_original>
// kernel: tpu_custom_call.1
$region0: #{tpu_custom_call.1}
  #allocation0 [shape = 'u32[]', space=smem, size = 0x4, offset = 0x4, fixed_abs, tag = 'smem constant byte address 0x4 - core index']
  #allocation1 [shape = 'u32[144,128]{1,0:T(1,128)}', space=vmem, size = 0x12000, scoped, tag = 'internal scratch']
  #allocation2 [shape = 's32[1]{0}', space=sflag, size = 0x4, scoped, tag = 'scoped memory for tpu_custom_call.1']
  #allocation3 [shape = 'u8[512]{0}', space=smem, size = 0x200, scoped, tag = 'prefetched SMEM operand 0']
  %s0 = inlined_call_operand.hbm [shape: s32[2], index: 0, kind: input, shape index: {}]
  %s1 = inlined_call_operand.hbm [shape: f32[3,8,2,128], index: 1, kind: input, shape index: {}]
  %s2 = inlined_call_operand.hbm [shape: f32[3,2,2,128], index: 2, kind: output, shape index: {}]
  %s3 = sld [smem:[#allocation0]]
  $region41: #{tpu_custom_call.1} parent=0
    _
  %s5 = ssub.s32 1, %s3
  %s6 = scalar_select 0, %s5, %s3
  %8 = dma.hbm_to_smem %s0, 16, [#allocation3], [#allocation2]
  %9 = dma.done [#allocation2], 16
  %10 = sfence
  $region1: #{tpu_custom_call.1} parent=0
    #allocation4 [shape = 'u8[6144]{0}', space=vmem, size = 0x1800, scoped, tag = 'input window, operand 1']
    #allocation5 [shape = 's32[2]{0}', space=sflag, size = 0x8, scoped, tag = 'scoped memory for tpu_custom_call.1']
    #allocation6 [shape = 's32[2]{0}', space=sflag, size = 0x8, scoped, tag = 'scoped memory for tpu_custom_call.1']
    #allocation7 [shape = 'u8[6144]{0}', space=vmem, size = 0x1800, scoped, tag = 'output window, operand 0']
    %11 = vsyncpa [#allocation5], 0
    %s12 = scalar_lea.sflag [#allocation5], 1
    %13 = vsyncpa %s12, 0
    %14 = vsyncpa [#allocation6], 0
    %s15 = scalar_lea.sflag [#allocation6], 1
    %16 = vsyncpa %s15, 0
    loop: start=0, step=1, limit=4
    $region2: #{tpu_custom_call.1} parent=1 // loop_pre_header
      _
    $region3: #{tpu_custom_call.1} parent=1 // loop_header
      %s18 = sphi 0, %s22
      %p19 = scmp.ge.s32.totalorder %s18, 4
      %s30 = sphi 0, %s32
      %s33 = sphi 0, %s30
      %s34 = sphi 0, %s33
      %s50 = sphi 0, %s34
      %s56 = sphi 0, %s58
      %s59 = sphi 0, %s56
      %s60 = sphi 0, %s59
      %s76 = sphi 0, %s60
    $region4: #{tpu_custom_call.1} parent=1 // loop_header_branch
      %21 = sbr.rel (%p19) target = $region8
    $region5: #{tpu_custom_call.1} parent=1 // loop_body
      %s23 = ssub.s32 %s18, 1
      %s24 = ssub.s32 %s18, 2
      %s25 = sadd.s32 %s18, 1
      %s26 = sld [smem:[#allocation3 + %s18]]
      %s27 = sld [smem:[#allocation3 + %s25]]
      %s28 = ssub.s32 %s26, %s27
      %p29 = scmp.eq.s32.totalorder %s28, 0
      %s31 = sadd.s32 %s30, 1
      %s32 = scalar_select %p29, %s30, %s31
      %p35 = pneg %p29
      %p36 = scmp.eq.s32.totalorder %s18, 1
      %p37 = por %p35, %p36
      %p38 = scmp.ne.s32.totalorder %s30, %s33
      %p39 = scmp.eq.s32.totalorder %s18, 0
      %p40 = por %p38, %p39
      %p41 = scmp.ne.s32.totalorder %s30, %s33
      %p42 = scmp.eq.s32.totalorder %s23, 1
      %p43 = por %p41, %p42
      %p44 = scmp.ne.s32.totalorder %s33, %s34
      %p45 = scmp.eq.s32.totalorder %s23, 0
      %p46 = por %p44, %p45
      %p47 = scmp.ne.s32.totalorder %s33, %s34
      %p48 = scmp.eq.s32.totalorder %s24, 1
      %p49 = por %p47, %p48
      %p51 = scmp.ne.s32.totalorder %s34, %s50
      %p52 = scmp.eq.s32.totalorder %s24, 0
      %p53 = por %p51, %p52
      %s54 = ssub.s32 %s18, %s25
      %p55 = scmp.eq.s32.totalorder %s54, 0
      %s57 = sadd.s32 %s56, 1
      %s58 = scalar_select %p55, %s56, %s57
      %p61 = pneg %p55
      %p62 = scmp.eq.s32.totalorder %s18, 1
      %p63 = por %p61, %p62
      %p64 = scmp.ne.s32.totalorder %s56, %s59
      %p65 = scmp.eq.s32.totalorder %s18, 0
      %p66 = por %p64, %p65
      %p67 = scmp.ne.s32.totalorder %s56, %s59
      %p68 = scmp.eq.s32.totalorder %s23, 1
      %p69 = por %p67, %p68
      %p70 = scmp.ne.s32.totalorder %s59, %s60
      %p71 = scmp.eq.s32.totalorder %s23, 0
      %p72 = por %p70, %p71
      %p73 = scmp.ne.s32.totalorder %s59, %s60
      %p74 = scmp.eq.s32.totalorder %s24, 1
      %p75 = por %p73, %p74
      %p77 = scmp.ne.s32.totalorder %s60, %s76
      %p78 = scmp.eq.s32.totalorder %s24, 0
      %p79 = por %p77, %p78
      %p80 = scmp.le.s32.totalorder 1, %s18
      %p81 = scmp.lt.s32.totalorder %s18, 3
      %p82 = pnand %p80, %p81
      %p83 = pneg %p82
      // Predicated region
      $region9: #{tpu_custom_call.1} parent=5 // pred_check
        _
      $region10: #{tpu_custom_call.1} parent=5 // pred_check_branch
        %85 = sbr.rel (%p82) target = $region12
      $region11: #{tpu_custom_call.1} parent=5 // pred_region
        %s86 = ssub.s32 %s18, 1
      $region12: #{tpu_custom_call.1} parent=5 // pred_fallthru
        _
      %p87 = scmp.lt.s32.totalorder %s18, 2
      // Predicated region
      $region13: #{tpu_custom_call.1} parent=5 // pred_check
        %p88 = pneg %p87
      $region14: #{tpu_custom_call.1} parent=5 // pred_check_branch
        %90 = sbr.rel (%p88) target = $region16
      $region15: #{tpu_custom_call.1} parent=5 // pred_region
        // Predicated region
        $region17: #{tpu_custom_call.1} parent=15 // pred_check
          %p91 = pneg %p40
        $region18: #{tpu_custom_call.1} parent=15 // pred_check_branch
          %93 = sbr.rel (%p91) target = $region20
        $region19: #{tpu_custom_call.1} parent=15 // pred_region
          %s94 = sand.u32 %s30, 1
          %s95 = scalar_lea.sflag [#allocation5], %s94
          %s96 = sand.u32 %s30, 1
          %s97 = smul.addr %s96, 6
          %s98 = scalar_lea.vmem [#allocation4], %s97
          %s99 = sld [smem:[#allocation3 + %s18]]
          %s101 = ssub.s32 96, 96
          %102 = vsyncadd %s95, %s101
          %s103 = smul.addr %s99, 32
          %s104 = scalar_lea.hbm %s1, %s103
          %s105 = sshll.u32 %s98, 4
          %s106 = int_to_ptr.vmem [resolvable:$true] %s105
          %111 = dma.hbm_to_vmem [thread:$0]  %s104, 96, %s106, %s95, 256, 32, 2
        $region20: #{tpu_custom_call.1} parent=15 // pred_fallthru
          _
      $region16: #{tpu_custom_call.1} parent=5 // pred_fallthru
        _
      %p112 = scmp.le.s32.totalorder 1, %s18
      %p113 = scmp.lt.s32.totalorder %s18, 3
      %p114 = pnand %p112, %p113
      %p115 = pneg %p114
      // Predicated region
      $region21: #{tpu_custom_call.1} parent=5 // pred_check
        _
      $region22: #{tpu_custom_call.1} parent=5 // pred_check_branch
        %117 = sbr.rel (%p114) target = $region24
      $region23: #{tpu_custom_call.1} parent=5 // pred_region
        %s118 = ssub.s32 %s18, 1
        %s119 = sand.u32 %s33, 1
        %s120 = scalar_lea.sflag [#allocation5], %s119
        %s121 = sand.u32 %s33, 1
        %s122 = smul.addr %s121, 6
        %s123 = scalar_lea.vmem [#allocation4], %s122
        // Predicated region
        $region25: #{tpu_custom_call.1} parent=23 // pred_check
          %p124 = pneg %p46
        $region26: #{tpu_custom_call.1} parent=23 // pred_check_branch
          %126 = sbr.rel (%p124) target = $region28
        $region27: #{tpu_custom_call.1} parent=23 // pred_region
          %127 = dma.done %s120, 96
        $region28: #{tpu_custom_call.1} parent=23 // pred_fallthru
          _
        %s128 = sand.u32 %s33, 1
        %s129 = scalar_lea.sflag [#allocation5], %s128
        %s130 = sand.u32 %s33, 1
        %s131 = smul.addr %s130, 6
        %s132 = scalar_lea.vmem [#allocation4], %s131
        %p133 = pneg %p46
        %p134 = pneg %p43
        %p135 = pneg %p72
        %p136 = pneg %p69
        %s137 = sand.u32 %s59, 1
        %s138 = scalar_lea.sflag [#allocation6], %s137
        %s139 = sand.u32 %s59, 1
        %s140 = smul.addr %s139, 6
        %s141 = scalar_lea.vmem [#allocation7], %s140
        %s142 = sld [smem:[#allocation3 + %s23]]
        %v143 = vld [vmem:[%s123] sm:$0x3]
        %v144 = vld [vmem:[%s123 + $0x2] sm:$0x3]
        %v145 = vld [vmem:[%s123 + $0x4] sm:$0x3]
        %146 = vst [vmem:[%s141] sm:$0x3] %v143
        %147 = vst [vmem:[%s141 + $0x2] sm:$0x3] %v144
        %148 = vst [vmem:[%s141 + $0x4] sm:$0x3] %v145
        %s149 = sand.u32 %s59, 1
        %s150 = scalar_lea.sflag [#allocation6], %s149
        %s151 = sand.u32 %s59, 1
        %s152 = smul.addr %s151, 6
        %s153 = scalar_lea.vmem [#allocation7], %s152
        // Predicated region
        $region29: #{tpu_custom_call.1} parent=23 // pred_check
          %p154 = pneg %p69
        $region30: #{tpu_custom_call.1} parent=23 // pred_check_branch
          %156 = sbr.rel (%p154) target = $region32
        $region31: #{tpu_custom_call.1} parent=23 // pred_region
          %s158 = ssub.s32 96, 96
          %159 = vsyncadd %s150, %s158
          %s160 = smul.addr %s23, 32
          %s161 = scalar_lea.hbm %s2, %s160
          %s162 = sshll.u32 %s153, 4
          %s163 = int_to_ptr.vmem [resolvable:$true] %s162
          %168 = dma.vmem_to_hbm [thread:$0]  %s163, 96, %s161, %s150, 32, 64, 2
        $region32: #{tpu_custom_call.1} parent=23 // pred_fallthru
          _
      $region24: #{tpu_custom_call.1} parent=5 // pred_fallthru
        _
      %p169 = scmp.le.s32.totalorder 2, %s18
      // Predicated region
      $region33: #{tpu_custom_call.1} parent=5 // pred_check
        %p170 = pneg %p169
      $region34: #{tpu_custom_call.1} parent=5 // pred_check_branch
        %172 = sbr.rel (%p170) target = $region36
      $region35: #{tpu_custom_call.1} parent=5 // pred_region
        %s173 = ssub.s32 %s18, 2
        // Predicated region
        $region37: #{tpu_custom_call.1} parent=35 // pred_check
          %p174 = pneg %p75
        $region38: #{tpu_custom_call.1} parent=35 // pred_check_branch
          %176 = sbr.rel (%p174) target = $region40
        $region39: #{tpu_custom_call.1} parent=35 // pred_region
          %s177 = sand.u32 %s60, 1
          %s178 = scalar_lea.sflag [#allocation6], %s177
          %s179 = sand.u32 %s60, 1
          %s180 = smul.addr %s179, 6
          %s181 = scalar_lea.vmem [#allocation7], %s180
          %182 = dma.done %s178, 96
        $region40: #{tpu_custom_call.1} parent=35 // pred_fallthru
          _
      $region36: #{tpu_custom_call.1} parent=5 // pred_fallthru
        _
    $region6: #{tpu_custom_call.1} parent=1 // loop_footer
      %s22 = sadd.s32 1, %s18
    $region7: #{tpu_custom_call.1} parent=1 // loop_footer_branch
      %17 = sbr.rel target = $region3
    $region8: #{tpu_custom_call.1} parent=1 // loop_exit
      _
    %183 = vsyncpa [#allocation5], 1
    %s184 = scalar_lea.sflag [#allocation5], 1
    %185 = vsyncpa %s184, 1
    %186 = vsyncpa [#allocation6], 1
    %s187 = scalar_lea.sflag [#allocation6], 1
    %188 = vsyncpa %s187, 1

</llo_original>
